<compile_context>
chip_gen: v7x
topology: tpu7x:2x2x1
jax: 0.10.0
libtpu: 0.0.40
codegen_flags: <defaults>
</compile_context>

<pallas_src>
import math

import jax
import jax.numpy as jnp
from jax.experimental import pallas as pl
from jax.experimental.pallas import tpu as pltpu


# ---------------------------------------------------------------------------
# small helpers
# ---------------------------------------------------------------------------
def _round_up(x: int, m: int) -> int:
    return ((x + m - 1) // m) * m


def _maybe_pad2d(x, rows, cols):
    """Zero-pad a 2-D array to (rows, cols); no-op when already that shape."""
    if x.shape == (rows, cols):
        return x
    return jnp.pad(x, ((0, rows - x.shape[0]), (0, cols - x.shape[1])))


def _vmem_limit_bytes() -> int:
    """Scoped-VMEM limit: most of physical VMEM, with headroom."""
    cap = 64 * 1024 * 1024                      # conservative (v7x per-core)
    try:
        cap = int(pltpu.get_tpu_info().vmem_capacity_bytes)
    except Exception:
        pass
    # v5e/v6e (128 MiB) -> ~110 MiB, v7x (64 MiB) -> ~52 MiB; always >= 32 MiB
    # (above every generation's scoped-VMEM default).
    return max(32 * 1024 * 1024,
               min(cap - 12 * 1024 * 1024, 110 * 1024 * 1024))


# ---------------------------------------------------------------------------
# fused GC kernels:  out = A @ (X @ W) + b  in a single pallas_call
# grid = (row tiles of A, k tiles over the N-sized reduction)
# ---------------------------------------------------------------------------
def _gc_fused_axw_kernel(a_ref, x_ref, w_ref, b_ref, o_ref, acc_ref):
    """(A@X)@W + b. acc_ref accumulates A@X in f32; epilogue multiplies by the
    resident f32 W and adds bias (no bf16 rounding of the intermediate)."""
    k = pl.program_id(1)

    @pl.when(k == 0)
    def _():
        acc_ref[...] = jnp.zeros_like(acc_ref)

    # A arrives in f32 (no wrapper cast/pad pass); the bf16 cast is VPU filler.
    a_blk = a_ref[...].astype(jnp.bfloat16)
    acc_ref[...] += jnp.dot(a_blk, x_ref[...],
                            preferred_element_type=jnp.float32)

    @pl.when(k == pl.num_programs(1) - 1)
    def _():
        o_ref[...] = (jnp.dot(acc_ref[...], w_ref[...],
                              preferred_element_type=jnp.float32)
                      + b_ref[...]).astype(o_ref.dtype)


def _gc_fused_xwa_kernel(a_ref, x_ref, w_ref, b_ref, o_ref):
    """A@(X@W) + b. X@W is recomputed per k step (cheap; W resident) and the
    big matmul accumulates directly into the f32 output block (no scratch)."""
    k = pl.program_id(1)

    @pl.when(k == 0)
    def _():
        o_ref[...] = jnp.zeros_like(o_ref)

    s = jnp.dot(x_ref[...], w_ref[...],
                preferred_element_type=jnp.float32).astype(jnp.bfloat16)
    a_blk = a_ref[...].astype(jnp.bfloat16)
    o_ref[...] += jnp.dot(a_blk, s, preferred_element_type=jnp.float32)

    @pl.when(k == pl.num_programs(1) - 1)
    def _():
        o_ref[...] = o_ref[...] + b_ref[...]


def _pick_fused_tiles(m, kd, f_in_pad, f_out_pad, acc_cols, w_bytes, budget):
    """Largest (tm, tk) whose double-buffered working set fits the budget."""
    for tm_c in (2048, 1536, 1024, 768, 512, 384, 256, 128, 64, 32, 16):
        tm = min(tm_c, _round_up(m, 16))
        for tk_c in (1024, 512, 256, 128):
            tk = min(tk_c, _round_up(kd, 128))
            need = (2 * tm * tk * 4                       # A tile (f32), x2 buf
                    + 2 * tk * f_in_pad * 2               # X tile (bf16), x2
                    + 2 * f_in_pad * f_out_pad * w_bytes  # resident W
                    + 2 * f_out_pad * 4                   # bias
                    + 2 * tm * f_out_pad * 4              # out tile (f32), x2
                    + tm * acc_cols * 4)                  # f32 acc scratch
            if need <= budget:
                return tm, tk
    return None


def _gc_layer_fused(adjacency, node_features, weight, bias, vmem_limit):
    m, kd = adjacency.shape
    in_f, out_f = weight.shape
    assert node_features.shape == (kd, in_f)

    f_in_pad = _round_up(in_f, 128)
    f_out_pad = _round_up(out_f, 128)
    budget = int(vmem_limit * 0.9)

    # Association: (A@X)@W when in_f <= out_f (fewer MXU flops), else A@(X@W).
    case_axw = in_f <= out_f
    acc_cols = f_in_pad if case_axw else 0
    w_bytes = 4 if case_axw else 2

    tiles = _pick_fused_tiles(m, kd, f_in_pad, f_out_pad,
                              acc_cols, w_bytes, budget)
    if tiles is None:
        return None                   # feature dims too fat for VMEM residency
    tm, tk = tiles

    # v7x megacore: prefer >= 2 parallel row tiles once rows are big enough.
    if tm >= m and m >= 512:
        tm = max(128, _round_up((m + 1) // 2, 128))

    mp, kp = _round_up(m, tm), _round_up(kd, tk)
    num_i = mp // tm

    a_p = _maybe_pad2d(adjacency, mp, kp)                        # stays f32
    x_p = _maybe_pad2d(node_features.astype(jnp.bfloat16), kp, f_in_pad)
    w_p = _maybe_pad2d(weight if case_axw else weight.astype(jnp.bfloat16),
                       f_in_pad, f_out_pad)
    b_p = _maybe_pad2d(bias.astype(jnp.float32).reshape(1, -1), 1, f_out_pad)

    if case_axw:
        kernel = _gc_fused_axw_kernel
        scratch = [pltpu.VMEM((tm, f_in_pad), jnp.float32)]
        flops = 2 * mp * kp * f_in_pad + 2 * mp * f_in_pad * f_out_pad
    else:
        kernel = _gc_fused_xwa_kernel
        scratch = []
        flops = 2 * mp * kp * f_out_pad + 2 * num_i * kp * f_in_pad * f_out_pad

    cost = pl.CostEstimate(
        flops=flops, transcendentals=0,
        bytes_accessed=(mp * kp * 4 + num_i * kp * f_in_pad * 2
                        + f_in_pad * f_out_pad * w_bytes + f_out_pad * 4
                        + mp * f_out_pad * 4))

    out = pl.pallas_call(
        kernel,
        out_shape=jax.ShapeDtypeStruct((mp, f_out_pad), jnp.float32),
        grid_spec=pltpu.PrefetchScalarGridSpec(
            num_scalar_prefetch=0,
            grid=(num_i, kp // tk),
            in_specs=[
                pl.BlockSpec((tm, tk), lambda i, k: (i, k)),               # A
                pl.BlockSpec((tk, f_in_pad), lambda i, k: (k, 0)),         # X
                pl.BlockSpec((f_in_pad, f_out_pad), lambda i, k: (0, 0)),  # W
                pl.BlockSpec((1, f_out_pad), lambda i, k: (0, 0)),         # b
            ],
            out_specs=pl.BlockSpec((tm, f_out_pad), lambda i, k: (i, 0)),
            scratch_shapes=scratch,
        ),
        compiler_params=pltpu.CompilerParams(
            dimension_semantics=("parallel", "arbitrary"),
            vmem_limit_bytes=vmem_limit),
        cost_estimate=cost,
    )(a_p, x_p, w_p, b_p)
    return out[:m, :out_f]


# ---------------------------------------------------------------------------
# fallback: general tiled matmul (only used when feature dims are too large
# for the fused kernel's VMEM residency) — bias-free and bias variants.
# ---------------------------------------------------------------------------
def _mm_kernel(a_ref, b_ref, o_ref, acc_ref):
    k = pl.program_id(2)

    @pl.when(k == 0)
    def _():
        acc_ref[...] = jnp.zeros_like(acc_ref)

    acc_ref[...] += jnp.dot(a_ref[...], b_ref[...],
                            preferred_element_type=jnp.float32)

    @pl.when(k == pl.num_programs(2) - 1)
    def _():
        o_ref[...] = acc_ref[...].astype(o_ref.dtype)


def _mm_bias_kernel(a_ref, b_ref, bias_ref, o_ref, acc_ref):
    k = pl.program_id(2)

    @pl.when(k == 0)
    def _():
        acc_ref[...] = jnp.zeros_like(acc_ref)

    acc_ref[...] += jnp.dot(a_ref[...], b_ref[...],
                            preferred_element_type=jnp.float32)

    @pl.when(k == pl.num_programs(2) - 1)
    def _():
        o_ref[...] = (acc_ref[...] + bias_ref[...]).astype(o_ref.dtype)


def _tiled_matmul(a, b, bias=None, *, out_dtype, vmem_limit,
                  compute_dtype=jnp.bfloat16):
    m, k = a.shape
    _, n = b.shape
    tm = min(1024, _round_up(m, 16))
    tn = min(1024, _round_up(n, 128))
    tk = min(512, _round_up(k, 128))
    mp, kp, np_ = _round_up(m, tm), _round_up(k, tk), _round_up(n, tn)

    a_p = _maybe_pad2d(a.astype(compute_dtype), mp, kp)
    b_p = _maybe_pad2d(b.astype(compute_dtype), kp, np_)

    in_specs = [pl.BlockSpec((tm, tk), lambda i, j, kk: (i, kk)),
                pl.BlockSpec((tk, tn), lambda i, j, kk: (kk, j))]
    args = [a_p, b_p]
    kernel = _mm_kernel
    if bias is not None:
        in_specs.append(pl.BlockSpec((1, tn), lambda i, j, kk: (0, j)))
        args.append(_maybe_pad2d(bias.astype(jnp.float32).reshape(1, -1), 1, np_))
        kernel = _mm_bias_kernel

    out = pl.pallas_call(
        kernel,
        out_shape=jax.ShapeDtypeStruct((mp, np_), out_dtype),
        grid_spec=pltpu.PrefetchScalarGridSpec(
            num_scalar_prefetch=0,
            grid=(mp // tm, np_ // tn, kp // tk),
            in_specs=in_specs,
            out_specs=pl.BlockSpec((tm, tn), lambda i, j, kk: (i, j)),
            scratch_shapes=[pltpu.VMEM((tm, tn), jnp.float32)],
        ),
        compiler_params=pltpu.CompilerParams(
            dimension_semantics=("parallel", "parallel", "arbitrary"),
            vmem_limit_bytes=vmem_limit),
    )(*args)
    return out[:m, :n]


# ---------------------------------------------------------------------------
# public forward
# ---------------------------------------------------------------------------
@jax.jit
def gc_layer(adjacency, node_features, weight, bias):
    """Forward of GCLayer: adjacency @ (node_features @ weight) + bias."""
    vmem_limit = _vmem_limit_bytes()
    out = _gc_layer_fused(adjacency, node_features, weight, bias, vmem_limit)
    if out is not None:
        return out
    # Fallback: feature dims too large for W / X residency in VMEM.
    in_f, out_f = weight.shape
    if in_f <= out_f:
        tmp = _tiled_matmul(adjacency, node_features, out_dtype=jnp.bfloat16,
                            vmem_limit=vmem_limit)
        return _tiled_matmul(tmp, weight, bias=bias, out_dtype=jnp.float32,
                             vmem_limit=vmem_limit)
    tmp = _tiled_matmul(node_features, weight, out_dtype=jnp.bfloat16,
                        vmem_limit=vmem_limit)
    return _tiled_matmul(adjacency, tmp, bias=bias, out_dtype=jnp.float32,
                         vmem_limit=vmem_limit)


def init_params(key, in_features, out_features):
    # nn.init.xavier_uniform_: U(-a, a), a = sqrt(6 / (fan_in + fan_out))
    bound = math.sqrt(6.0 / (in_features + out_features))
    weight = jax.random.uniform(key, (in_features, out_features), jnp.float32,
                                minval=-bound, maxval=bound)
    bias = jnp.zeros((out_features,), jnp.float32)   # nn.init.zeros_
    return weight, bias


def gc_reference_mxu(adjacency, node_features, weight, bias):
    """Pure-JAX mirror of the kernel arithmetic (bf16 MXU inputs, f32 acc)."""
    cd = jnp.bfloat16
    in_f, out_f = weight.shape
    if in_f <= out_f:                                     # (A@X)@W, f32 W mult
        t = jnp.dot(adjacency.astype(cd), node_features.astype(cd),
                    preferred_element_type=jnp.float32)
        return jnp.dot(t, weight, preferred_element_type=jnp.float32) + bias
    s = jnp.dot(node_features.astype(cd), weight.astype(cd),
                preferred_element_type=jnp.float32).astype(cd)
    return jnp.dot(adjacency.astype(cd), s,
                   preferred_element_type=jnp.float32) + bias


if __name__ == "__main__":
    key = jax.random.PRNGKey(0)
    (k_adj, k_feat, k_w, k_b,
     k_adj2, k_feat2, k_w2, k_b2) = jax.random.split(key, 8)

    # --- small demo shapes (case (A@X)@W: in_f <= out_f, single k tile) -----
    num_nodes, in_features, out_features = 8, 16, 32
    adjacency = jax.random.uniform(k_adj, (num_nodes, num_nodes), jnp.float32)
    node_features = jax.random.normal(k_feat, (num_nodes, in_features),
                                      jnp.float32)
    weight, _ = init_params(k_w, in_features, out_features)
    # Random bias (module init is zeros) so the bias-add path is exercised.
    bias = jax.random.normal(k_b, (out_features,), jnp.float32)

    out = jax.block_until_ready(gc_layer(adjacency, node_features, weight, bias))
    assert out.shape == (num_nodes, out_features)

    ref_mxu = gc_reference_mxu(adjacency, node_features, weight, bias)
    ref_f32 = adjacency @ (node_features @ weight) + bias
    assert jnp.allclose(out, ref_mxu, rtol=2e-2, atol=2e-2), "mxu-ref mismatch (small)"
    assert jnp.allclose(out, ref_f32, rtol=1e-1, atol=1e-1), "f32-ref mismatch (small)"

    # --- second config (case A@(X@W): in_f > out_f, multi row/k tiles) ------
    n2, f_in2, f_out2 = 1500, 64, 48
    adjacency2 = jax.random.uniform(k_adj2, (n2, n2), jnp.float32)
    features2 = jax.random.normal(k_feat2, (n2, f_in2), jnp.float32)
    weight2, _ = init_params(k_w2, f_in2, f_out2)
    bias2 = jax.random.normal(k_b2, (f_out2,), jnp.float32)

    out2 = jax.block_until_ready(gc_layer(adjacency2, features2, weight2, bias2))
    assert out2.shape == (n2, f_out2)
    ref2_mxu = gc_reference_mxu(adjacency2, features2, weight2, bias2)
    ref2_f32 = adjacency2 @ (features2 @ weight2) + bias2
    assert jnp.allclose(out2, ref2_mxu, rtol=2e-2, atol=2e-2), "mxu-ref mismatch (big)"
    assert jnp.allclose(out2, ref2_f32, rtol=5e-2, atol=1.0), "f32-ref mismatch (big)"

    print("KERNEL_OK")
</pallas_src>

<mosaic_0001>
module attributes {stable_mosaic.version = 11 : i64} {
  func.func @_gc_fused_axw_kernel(%arg0: i32, %arg1: i32, %arg2: memref<16x128xf32, #tpu.memory_space<vmem>>, %arg3: memref<128x128xbf16, #tpu.memory_space<vmem>>, %arg4: memref<128x128xf32, #tpu.memory_space<vmem>>, %arg5: memref<1x128xf32, #tpu.memory_space<vmem>>, %arg6: memref<16x128xf32, #tpu.memory_space<vmem>>, %arg7: memref<16x128xf32, #tpu.memory_space<vmem>>) attributes {dimension_semantics = [#tpu.dimension_semantics<parallel>, #tpu.dimension_semantics<arbitrary>], iteration_bounds = array<i64: 1, 1>, scalar_prefetch = 0 : i64, scratch_operands = 1 : i64, tpu.core_type = #tpu.core_type<tc>, window_params = [{transform_indices = @transform_0, window_bounds = array<i64: 16, 128>}, {transform_indices = @transform_1, window_bounds = array<i64: 128, 128>}, {pipeline_mode = #tpu.pipeline_mode<synchronous>, transform_indices = @transform_2, window_bounds = array<i64: 128, 128>}, {pipeline_mode = #tpu.pipeline_mode<synchronous>, transform_indices = @transform_3, window_bounds = array<i64: 1, 128>}, {transform_indices = @transform_4, window_bounds = array<i64: 16, 128>}]} {
    %c0_i32 = arith.constant 0 : i32
    %0 = arith.cmpi eq, %arg1, %c0_i32 : i32
    %1 = arith.extui %0 : i1 to i32
    %c0_i32_0 = arith.constant 0 : i32
    %2 = arith.cmpi ne, %1, %c0_i32_0 : i32
    scf.if %2 {
      %cst_10 = arith.constant 0.000000e+00 : f32
      %13 = vector.broadcast %cst_10 : f32 to vector<16x128xf32>
      %c0_11 = arith.constant 0 : index
      %c0_12 = arith.constant 0 : index
      %14 = vector.load %arg7[%c0_11, %c0_12] : memref<16x128xf32, #tpu.memory_space<vmem>>, vector<16x128xf32>
      tpu.vector_store %arg7[%c0_11, %c0_12], %13 {strides = array<i32>} : memref<16x128xf32, #tpu.memory_space<vmem>>, vector<16x128xf32>,
    } else {
    }
    %c0 = arith.constant 0 : index
    %c0_1 = arith.constant 0 : index
    %3 = vector.load %arg2[%c0, %c0_1] : memref<16x128xf32, #tpu.memory_space<vmem>>, vector<16x128xf32>
    %4 = arith.truncf %3 : vector<16x128xf32> to vector<16x128xbf16>
    %c0_2 = arith.constant 0 : index
    %c0_3 = arith.constant 0 : index
    %5 = vector.load %arg7[%c0_2, %c0_3] : memref<16x128xf32, #tpu.memory_space<vmem>>, vector<16x128xf32>
    %c0_4 = arith.constant 0 : index
    %c0_5 = arith.constant 0 : index
    %6 = vector.load %arg3[%c0_4, %c0_5] : memref<128x128xbf16, #tpu.memory_space<vmem>>, vector<128x128xbf16>
    %cst = arith.constant dense<0.000000e+00> : vector<16x128xf32>
    %7 = tpu.matmul %4, %6, %cst {dimension_numbers = #tpu.dot_dimension_numbers<[1], [0], [0], [1], [0, 0, 1, 1], [], []>} : vector<16x128xbf16>, vector<128x128xbf16>, vector<16x128xf32> -> vector<16x128xf32>
    %8 = arith.addf %5, %7 : vector<16x128xf32>
    %c0_6 = arith.constant 0 : index
    %c0_7 = arith.constant 0 : index
    %9 = vector.load %arg7[%c0_6, %c0_7] : memref<16x128xf32, #tpu.memory_space<vmem>>, vector<16x128xf32>
    tpu.vector_store %arg7[%c0_6, %c0_7], %8 {strides = array<i32>} : memref<16x128xf32, #tpu.memory_space<vmem>>, vector<16x128xf32>,
    %c0_i32_8 = arith.constant 0 : i32
    %10 = arith.cmpi eq, %arg1, %c0_i32_8 : i32
    %11 = arith.extui %10 : i1 to i32
    %c0_i32_9 = arith.constant 0 : i32
    %12 = arith.cmpi ne, %11, %c0_i32_9 : i32
    scf.if %12 {
      %c0_10 = arith.constant 0 : index
      %c0_11 = arith.constant 0 : index
      %13 = vector.load %arg7[%c0_10, %c0_11] : memref<16x128xf32, #tpu.memory_space<vmem>>, vector<16x128xf32>
      %c0_12 = arith.constant 0 : index
      %c0_13 = arith.constant 0 : index
      %14 = vector.load %arg4[%c0_12, %c0_13] : memref<128x128xf32, #tpu.memory_space<vmem>>, vector<128x128xf32>
      %cst_14 = arith.constant dense<0.000000e+00> : vector<16x128xf32>
      %15 = tpu.matmul %13, %14, %cst_14 {dimension_numbers = #tpu.dot_dimension_numbers<[1], [0], [0], [1], [0, 0, 1, 1], [], []>} : vector<16x128xf32>, vector<128x128xf32>, vector<16x128xf32> -> vector<16x128xf32>
      %c0_15 = arith.constant 0 : index
      %c0_16 = arith.constant 0 : index
      %16 = vector.load %arg5[%c0_15, %c0_16] : memref<1x128xf32, #tpu.memory_space<vmem>>, vector<1x128xf32>
      %17 = vector.broadcast %16 : vector<1x128xf32> to vector<16x128xf32>
      %18 = arith.addf %15, %17 : vector<16x128xf32>
      %c0_17 = arith.constant 0 : index
      %c0_18 = arith.constant 0 : index
      %19 = vector.load %arg6[%c0_17, %c0_18] : memref<16x128xf32, #tpu.memory_space<vmem>>, vector<16x128xf32>
      tpu.vector_store %arg6[%c0_17, %c0_18], %18 {strides = array<i32>} : memref<16x128xf32, #tpu.memory_space<vmem>>, vector<16x128xf32>,
    } else {
    }
    return
  }
  func.func @transform_0(%arg0: i32, %arg1: i32) -> (i32, i32) {
    %c0_i32 = arith.constant 0 : i32
    return %arg0, %arg1 : i32, i32
  }
  func.func @transform_1(%arg0: i32, %arg1: i32) -> (i32, i32) {
    %c0_i32 = arith.constant 0 : i32
    %c0_i32_0 = arith.constant 0 : i32
    return %arg1, %c0_i32 : i32, i32
  }
  func.func @transform_2(%arg0: i32, %arg1: i32) -> (i32, i32) {
    %c0_i32 = arith.constant 0 : i32
    %c0_i32_0 = arith.constant 0 : i32
    %c0_i32_1 = arith.constant 0 : i32
    return %c0_i32, %c0_i32_0 : i32, i32
  }
  func.func @transform_3(%arg0: i32, %arg1: i32) -> (i32, i32) {
    %c0_i32 = arith.constant 0 : i32
    %c0_i32_0 = arith.constant 0 : i32
    %c0_i32_1 = arith.constant 0 : i32
    return %c0_i32, %c0_i32_0 : i32, i32
  }
  func.func @transform_4(%arg0: i32, %arg1: i32) -> (i32, i32) {
    %c0_i32 = arith.constant 0 : i32
    %c0_i32_0 = arith.constant 0 : i32
    return %arg0, %c0_i32 : i32, i32
  }
}

</mosaic_0001>

<llo_original>
// kernel: gc_layer.1
$region0: #{gc_layer.1}
  #allocation0 [shape = 'u32[]', space=smem, size = 0x4, offset = 0x4, fixed_abs, tag = 'smem constant byte address 0x4 - core index']
  #allocation1 [shape = 'u32[144,128]{1,0:T(1,128)}', space=vmem, size = 0x12000, scoped, tag = 'internal scratch']
  #allocation2 [shape = 'f32[16,128]{1,0:T(8,128)}', space=vmem, size = 0x2000, scoped, tag = 'scratch operand']
  %s0 = inlined_call_operand.vmem [shape: f32[16,128], index: 0, kind: input, shape index: {}]
  %s1 = inlined_call_operand.vmem [shape: bf16[128,128], index: 1, kind: input, shape index: {}]
  %s2 = inlined_call_operand.vmem [shape: f32[128,128], index: 2, kind: input, shape index: {}]
  %s3 = inlined_call_operand.vmem [shape: f32[1,128], index: 3, kind: input, shape index: {}]
  %s4 = inlined_call_operand.vmem [shape: f32[16,128], index: 4, kind: output, shape index: {}]
  %s5 = sld [smem:[#allocation0]]
  $region34: #{gc_layer.1} parent=0
    _
  %s7 = ssub.s32 1, %s5
  %s8 = scalar_select 0, %s7, %s5
  // Predicated region
  $region2: #{gc_layer.1} parent=0 // pred_check
    _
  $region3: #{gc_layer.1} parent=0 // pred_check_branch
    %10 = sbr.rel (0) target = $region5
  $region4: #{gc_layer.1} parent=0 // pred_region
    _
  $region5: #{gc_layer.1} parent=0 // pred_fallthru
    _
  // Predicated region
  $region6: #{gc_layer.1} parent=0 // pred_check
    _
  $region7: #{gc_layer.1} parent=0 // pred_check_branch
    %12 = sbr.rel (0) target = $region9
  $region8: #{gc_layer.1} parent=0 // pred_region
    _
  $region9: #{gc_layer.1} parent=0 // pred_fallthru
    _
  // Predicated region
  $region10: #{gc_layer.1} parent=0 // pred_check
    _
  $region11: #{gc_layer.1} parent=0 // pred_check_branch
    %14 = sbr.rel (0) target = $region13
  $region12: #{gc_layer.1} parent=0 // pred_region
    _
  $region13: #{gc_layer.1} parent=0 // pred_fallthru
    _
  // Predicated region
  $region14: #{gc_layer.1} parent=0 // pred_check
    _
  $region15: #{gc_layer.1} parent=0 // pred_check_branch
    %16 = sbr.rel (0) target = $region17
  $region16: #{gc_layer.1} parent=0 // pred_region
    _
  $region17: #{gc_layer.1} parent=0 // pred_fallthru
    _
  %p18 = scmp.eq.s32.totalorder 0, 0
  // Predicated region
  $region18: #{gc_layer.1} parent=0 // pred_check
    %p19 = pneg %p18
  $region19: #{gc_layer.1} parent=0 // pred_check_branch
    %21 = sbr.rel (%p19) target = $region21
  $region20: #{gc_layer.1} parent=0 // pred_region
    %22 = vst [vmem:[#allocation2] sm:$0xff] 0.0
    %23 = vst [vmem:[#allocation2 + $0x8] sm:$0xff] 0.0
  $region21: #{gc_layer.1} parent=0 // pred_fallthru
    _
  %v24 = vld [vmem:[%s0] sm:$0xff]
  %v25 = vld [vmem:[%s0 + $0x8] sm:$0xff]
  %v26 = vpack.c.bf16 %v25, %v24
  %v27 = vld [vmem:[#allocation2] sm:$0xff]
  %v28 = vld [vmem:[#allocation2 + $0x8] sm:$0xff]
  %v29 = vld [vmem:[%s1] sm:$0xf]
  %v30 = vld [vmem:[%s1 + $0x4] sm:$0xf]
  %v31 = vld [vmem:[%s1 + $0x8] sm:$0xf]
  %v32 = vld [vmem:[%s1 + $0xc] sm:$0xf]
  %v33 = vld [vmem:[%s1 + $0x10] sm:$0xf]
  %v34 = vld [vmem:[%s1 + $0x14] sm:$0xf]
  %v35 = vld [vmem:[%s1 + $0x18] sm:$0xf]
  %v36 = vld [vmem:[%s1 + $0x1c] sm:$0xf]
  %v37 = vld [vmem:[%s1 + $0x20] sm:$0xf]
  %v38 = vld [vmem:[%s1 + $0x24] sm:$0xf]
  %v39 = vld [vmem:[%s1 + $0x28] sm:$0xf]
  %v40 = vld [vmem:[%s1 + $0x2c] sm:$0xf]
  %v41 = vld [vmem:[%s1 + $0x30] sm:$0xf]
  %v42 = vld [vmem:[%s1 + $0x34] sm:$0xf]
  %v43 = vld [vmem:[%s1 + $0x38] sm:$0xf]
  %v44 = vld [vmem:[%s1 + $0x3c] sm:$0xf]
  %v61 = vunpack.c.l.b16 %v29
  %v62 = vunpack.c.l.b16 %v30
  %v63 = vunpack.c.l.b16 %v31
  %v64 = vunpack.c.l.b16 %v32
  %v65 = vunpack.c.l.b16 %v33
  %v66 = vunpack.c.l.b16 %v34
  %v67 = vunpack.c.l.b16 %v35
  %v68 = vunpack.c.l.b16 %v36
  %v69 = vunpack.c.l.b16 %v37
  %v70 = vunpack.c.l.b16 %v38
  %v71 = vunpack.c.l.b16 %v39
  %v72 = vunpack.c.l.b16 %v40
  %v73 = vunpack.c.l.b16 %v41
  %v74 = vunpack.c.l.b16 %v42
  %v75 = vunpack.c.l.b16 %v43
  %v76 = vunpack.c.l.b16 %v44
  %v77 = vpack.c.b16 %v62, %v61
  %v78 = vpack.c.b16 %v64, %v63
  %v79 = vpack.c.b16 %v66, %v65
  %v80 = vpack.c.b16 %v68, %v67
  %v81 = vpack.c.b16 %v70, %v69
  %v82 = vpack.c.b16 %v72, %v71
  %v83 = vpack.c.b16 %v74, %v73
  %v84 = vpack.c.b16 %v76, %v75
  %93 = vmatprep.subr.bf16.mxu0 0
  %94 = vmatpush1.bf16.msra.mxu0 %v77
  %95 = vmatprep.subr.bf16.mxu0 0
  %96 = vmatpush1.bf16.msra.mxu0 %v78
  %97 = vmatprep.subr.bf16.mxu0 0
  %98 = vmatpush1.bf16.msra.mxu0 %v79
  %99 = vmatprep.subr.bf16.mxu0 0
  %100 = vmatpush1.bf16.msra.mxu0 %v80
  %101 = vmatprep.subr.bf16.mxu0 0
  %102 = vmatpush1.bf16.msra.mxu0 %v81
  %103 = vmatprep.subr.bf16.mxu0 0
  %104 = vmatpush1.bf16.msra.mxu0 %v82
  %105 = vmatprep.subr.bf16.mxu0 0
  %106 = vmatpush1.bf16.msra.mxu0 %v83
  %107 = vmatprep.subr.bf16.mxu0 0
  %108 = vmatpush1.bf16.msra.mxu0 %v84
  %109 = vmatprep.subr.bf16.mxu0 0
  %110 = vmatpush1.bf16.msra.mxu0 0
  %111 = vmatprep.subr.bf16.mxu0 0
  %112 = vmatpush1.bf16.msra.mxu0 0
  %113 = vmatprep.subr.bf16.mxu0 0
  %114 = vmatpush1.bf16.msra.mxu0 0
  %115 = vmatprep.subr.bf16.mxu0 0
  %116 = vmatpush1.bf16.msra.mxu0 0
  %117 = vmatprep.subr.bf16.mxu0 0
  %118 = vmatpush1.bf16.msra.mxu0 0
  %119 = vmatprep.subr.bf16.mxu0 0
  %120 = vmatpush1.bf16.msra.mxu0 0
  %121 = vmatprep.subr.bf16.mxu0 0
  %122 = vmatpush1.bf16.msra.mxu0 0
  %123 = vmatprep.subr.bf16.mxu0 0
  %124 = vmatpush1.bf16.msra.mxu0 0
  %125 = vmatprep.mubr.bf16.mxu0 0
  %126 = vmatmul.mubr.bf16.gmra.mrb[0].mxu0 %v26
  %v127 = vpop.f32.mrb[0].mxu0
  %v128 = vadd.f32 0.0, %v127
  %v129 = vpop.f32.mrb[0].mxu0
  %v130 = vpop.f32.mrb[0].mxu0
  %v131 = vadd.f32 0.0, %v130
  %v132 = vpop.f32.mrb[0].mxu0
  %133 = vdwg.mxu0
  %v134 = vadd.f32 %v27, %v128
  %v135 = vadd.f32 %v28, %v131
  %136 = vst [vmem:[#allocation2] sm:$0xff] %v134
  %137 = vst [vmem:[#allocation2 + $0x8] sm:$0xff] %v135
  // Predicated region
  $region22: #{gc_layer.1} parent=0 // pred_check
    %p138 = pneg %p18
  $region23: #{gc_layer.1} parent=0 // pred_check_branch
    %140 = sbr.rel (%p138) target = $region25
  $region24: #{gc_layer.1} parent=0 // pred_region
    %v141 = vld [vmem:[#allocation2] sm:$0xff]
    %v142 = vld [vmem:[#allocation2 + $0x8] sm:$0xff]
    %v143 = vld [vmem:[%s2] sm:$0xff]
    %v144 = vld [vmem:[%s2 + $0x8] sm:$0xff]
    %v145 = vld [vmem:[%s2 + $0x10] sm:$0xff]
    %v146 = vld [vmem:[%s2 + $0x18] sm:$0xff]
    %v147 = vld [vmem:[%s2 + $0x20] sm:$0xff]
    %v148 = vld [vmem:[%s2 + $0x28] sm:$0xff]
    %v149 = vld [vmem:[%s2 + $0x30] sm:$0xff]
    %v150 = vld [vmem:[%s2 + $0x38] sm:$0xff]
    %v151 = vld [vmem:[%s2 + $0x40] sm:$0xff]
    %v152 = vld [vmem:[%s2 + $0x48] sm:$0xff]
    %v153 = vld [vmem:[%s2 + $0x50] sm:$0xff]
    %v154 = vld [vmem:[%s2 + $0x58] sm:$0xff]
    %v155 = vld [vmem:[%s2 + $0x60] sm:$0xff]
    %v156 = vld [vmem:[%s2 + $0x68] sm:$0xff]
    %v157 = vld [vmem:[%s2 + $0x70] sm:$0xff]
    %v158 = vld [vmem:[%s2 + $0x78] sm:$0xff]
    %v159 = vld [vmem:[%s3] sm:$0x1]
    %v161 = vlaneseq
    %v162 = vshrl.u32 %v161, 7
    %v163 = vsub.s32 0, %v162
    %v164 = vrot.slane %v159, %v163
    %166 = vmatprep.subr.mxu0 0.0
    %167 = vmatpush1.msra.mxu0 %v143
    %168 = vmatprep.subr.mxu0 0.0
    %169 = vmatpush1.msra.mxu0 %v144
    %170 = vmatprep.subr.mxu0 0.0
    %171 = vmatpush1.msra.mxu0 %v145
    %172 = vmatprep.subr.mxu0 0.0
    %173 = vmatpush1.msra.mxu0 %v146
    %174 = vmatprep.subr.mxu0 0.0
    %175 = vmatpush1.msra.mxu0 %v147
    %176 = vmatprep.subr.mxu0 0.0
    %177 = vmatpush1.msra.mxu0 %v148
    %178 = vmatprep.subr.mxu0 0.0
    %179 = vmatpush1.msra.mxu0 %v149
    %180 = vmatprep.subr.mxu0 0.0
    %181 = vmatpush1.msra.mxu0 %v150
    %182 = vmatprep.subr.mxu0 0.0
    %183 = vmatpush1.msra.mxu0 %v151
    %184 = vmatprep.subr.mxu0 0.0
    %185 = vmatpush1.msra.mxu0 %v152
    %186 = vmatprep.subr.mxu0 0.0
    %187 = vmatpush1.msra.mxu0 %v153
    %188 = vmatprep.subr.mxu0 0.0
    %189 = vmatpush1.msra.mxu0 %v154
    %190 = vmatprep.subr.mxu0 0.0
    %191 = vmatpush1.msra.mxu0 %v155
    %192 = vmatprep.subr.mxu0 0.0
    %193 = vmatpush1.msra.mxu0 %v156
    %194 = vmatprep.subr.mxu0 0.0
    %195 = vmatpush1.msra.mxu0 %v157
    %196 = vmatprep.subr.mxu0 0.0
    %197 = vmatpush1.msra.mxu0 %v158
    %198 = vmatprep.subr.mxu0 0.0
    %199 = vmatpush1.msra.mxu0 0.0
    %200 = vmatprep.subr.mxu0 0.0
    %201 = vmatpush1.msra.mxu0 0.0
    %202 = vmatprep.subr.mxu0 0.0
    %203 = vmatpush1.msra.mxu0 0.0
    %204 = vmatprep.subr.mxu0 0.0
    %205 = vmatpush1.msra.mxu0 0.0
    %206 = vmatprep.subr.mxu0 0.0
    %207 = vmatpush1.msra.mxu0 0.0
    %208 = vmatprep.subr.mxu0 0.0
    %209 = vmatpush1.msra.mxu0 0.0
    %210 = vmatprep.subr.mxu0 0.0
    %211 = vmatpush1.msra.mxu0 0.0
    %212 = vmatprep.subr.mxu0 0.0
    %213 = vmatpush1.msra.mxu0 0.0
    %214 = vmatprep.subr.mxu0 0.0
    %215 = vmatpush1.msra.mxu0 0.0
    %216 = vmatprep.subr.mxu0 0.0
    %217 = vmatpush1.msra.mxu0 0.0
    %218 = vmatprep.subr.mxu0 0.0
    %219 = vmatpush1.msra.mxu0 0.0
    %220 = vmatprep.subr.mxu0 0.0
    %221 = vmatpush1.msra.mxu0 0.0
    %222 = vmatprep.subr.mxu0 0.0
    %223 = vmatpush1.msra.mxu0 0.0
    %224 = vmatprep.subr.mxu0 0.0
    %225 = vmatpush1.msra.mxu0 0.0
    %226 = vmatprep.subr.mxu0 0.0
    %227 = vmatpush1.msra.mxu0 0.0
    %228 = vmatprep.subr.mxu0 0.0
    %229 = vmatpush1.msra.mxu0 0.0
    %230 = vmatprep.mubr.f32.mxu0 0.0
    %231 = vmatmul.mubr.f32.gmra.mrb[0].mxu0 %v141
    %v232 = vpop.f32.mrb[0].mxu0
    %v233 = vadd.f32 %v164, %v232
    %v234 = vpop.f32.mrb[0].mxu0
    %235 = vmatprep.mubr.f32.mxu0 0.0
    %236 = vmatmul.mubr.f32.gmra.mrb[0].mxu0 %v142
    %v237 = vpop.f32.mrb[0].mxu0
    %v238 = vadd.f32 %v164, %v237
    %v239 = vpop.f32.mrb[0].mxu0
    %240 = vdwg.mxu0
    %241 = vst [vmem:[%s4] sm:$0xff] %v233
    %242 = vst [vmem:[%s4 + $0x8] sm:$0xff] %v238
  $region25: #{gc_layer.1} parent=0 // pred_fallthru
    _
  // Predicated region
  $region26: #{gc_layer.1} parent=0 // pred_check
    _
  $region27: #{gc_layer.1} parent=0 // pred_check_branch
    %244 = sbr.rel (0) target = $region29
  $region28: #{gc_layer.1} parent=0 // pred_region
    _
  $region29: #{gc_layer.1} parent=0 // pred_fallthru
    _
  // Predicated region
  $region30: #{gc_layer.1} parent=0 // pred_check
    _
  $region31: #{gc_layer.1} parent=0 // pred_check_branch
    %246 = sbr.rel (0) target = $region33
  $region32: #{gc_layer.1} parent=0 // pred_region
    _
  $region33: #{gc_layer.1} parent=0 // pred_fallthru
    _

</llo_original>
